<compile_context>
chip_gen: v7x
topology: tpu7x:2x2x1
jax: 0.10.0
libtpu: 0.0.40
codegen_flags: <defaults>
</compile_context>

<pallas_src>
import functools

import jax
import jax.numpy as jnp
from jax import lax
from jax.experimental import pallas as pl
from jax.experimental.pallas import tpu as pltpu


def _nt_xent_kernel(z_row_ref, z_col_ref, lab_row_ref, lab_col_ref, out_ref,
                    denom_ref, num_ref, possum_ref, *,
                    inv_temp, n_valid, n_pad, tile, resident_cols):
    i = pl.program_id(0)          # row block    ("parallel")
    j = pl.program_id(1)          # column block ("arbitrary", reduction axis)

    @pl.when(j == 0)
    def _init():
        denom_ref[...] = jnp.zeros_like(denom_ref)
        num_ref[...] = jnp.zeros_like(num_ref)
        possum_ref[...] = jnp.zeros_like(possum_ref)

    # Embeddings / labels arrive pre-normalized (and possibly pre-cast to bf16)
    # from the wrapper: no per-tile normalization work in the hot loop.
    zr = z_row_ref[...]
    lab_r = lab_row_ref[...]
    if resident_cols:
        col0 = pl.multiple_of(j * tile, tile)
        zc = z_col_ref[pl.ds(col0, tile), :]
        lab_c = lab_col_ref[pl.ds(col0, tile), :]
    else:
        zc = z_col_ref[...]
        lab_c = lab_col_ref[...]

    dot_dims = (((1,), (1,)), ((), ()))
    if zr.dtype == jnp.bfloat16:
        # Fast path: bf16 operands, f32 accumulation (full-rate MXU everywhere).
        sim = lax.dot_general(zr, zc, dot_dims,
                              preferred_element_type=jnp.float32)
    else:
        # Parity path: f32 HIGHEST (matches the f32 reference to 1e-5).
        sim = lax.dot_general(zr, zc, dot_dims,
                              precision=lax.Precision.HIGHEST,
                              preferred_element_type=jnp.float32)
    sim = sim * inv_temp

    # positive_mask tile = label gram.  Labels are {0,1}: bf16 products are
    # exact and f32 accumulation is exact -> no HIGHEST emulation needed.
    if lab_r.dtype == jnp.bfloat16:
        pos = lax.dot_general(lab_r, lab_c, dot_dims,
                              preferred_element_type=jnp.float32)
    else:
        pos = lax.dot_general(lab_r, lab_c, dot_dims,
                              precision=lax.Precision.HIGHEST,
                              preferred_element_type=jnp.float32)

    exp_sim = jnp.exp(sim)

    denom_ref[...] += jnp.sum(exp_sim, axis=1, keepdims=True)
    possum_ref[...] += jnp.sum(pos, axis=1, keepdims=True)
    num_ref[...] += jnp.sum(sim * pos, axis=1, keepdims=True)

    # Remove diagonal terms (sim_ii / pos_ii); they only occur on diagonal
    # tiles.  zr is the exact (possibly bf16) operand the MXU saw, so the
    # correction cancels the matmul's diagonal term to f32 rounding.
    @pl.when(i == j)
    def _drop_diag():
        zr_f = zr.astype(jnp.float32)
        lab_f = lab_r.astype(jnp.float32)
        diag_sim = jnp.sum(zr_f * zr_f, axis=1, keepdims=True) * inv_temp
        diag_pos = jnp.sum(lab_f * lab_f, axis=1, keepdims=True)
        denom_ref[...] -= jnp.exp(diag_sim)
        possum_ref[...] -= diag_pos
        num_ref[...] -= diag_sim * diag_pos

    @pl.when(j == pl.num_programs(1) - 1)
    def _finalize():
        denom = denom_ref[...]
        if n_pad != n_valid:
            # Padded z rows are zero -> each padded column contributed exactly
            # exp(0) = 1 to every row's denominator: one scalar fix-up instead
            # of a per-cell iota/where mask.
            denom = denom - float(n_pad - n_valid)
        val = jnp.log(denom) - num_ref[...] / possum_ref[...]
        if n_pad != n_valid:
            # Padded rows would be 0/0 = NaN; write 0 so any reduction over
            # all n_pad rows stays finite (they are sliced off anyway).
            row_g = i * tile + lax.broadcasted_iota(jnp.int32, val.shape, 0)
            val = jnp.where(row_g < n_valid, val, 0.0)
        out_ref[...] = val


def _round_up(x, m):
    return (x + m - 1) // m * m


def _auto_tile(n):
    if n <= 128:
        return _round_up(max(n, 8), 8)
    n128 = _round_up(n, 128)
    tile = 512 if n128 >= 2048 else 256
    # Keep >= 2 row blocks so the "parallel" axis feeds both v7x TensorCores.
    while tile > 128 and n128 // tile < 2:
        tile //= 2
    return min(tile, n128)


def nt_xent_loss(z_i, z_j, dist_labels, *, temperature, tile=None,
                 use_bf16_matmul=False, binary_labels=True,
                 resident_cols=None):
    """NT_Xent.forward (world_size == 1) on TPU via a tiled Pallas kernel.

    use_bf16_matmul=True is the fast path (full-rate bf16 MXU and half the z
    HBM traffic); the f32 default exists only for 1e-5 parity with the
    f32 PyTorch reference.
    """
    z = jnp.concatenate([z_i, z_j], axis=0).astype(jnp.float32)
    lab = jnp.concatenate([dist_labels, dist_labels], axis=0).astype(jnp.float32)
    n, d = z.shape
    c = lab.shape[1]

    # L2-normalize ONCE here (F.normalize, p=2, dim=1, eps=1e-12).
    z = z / jnp.maximum(jnp.linalg.norm(z, axis=1, keepdims=True), 1e-12)
    if use_bf16_matmul:
        z = z.astype(jnp.bfloat16)
    if binary_labels:
        lab = lab.astype(jnp.bfloat16)   # exact for {0,1} labels

    if tile is None:
        tile = _auto_tile(n)
    tile = _round_up(max(8, min(tile, _round_up(n, 8))), 8)

    n_pad = _round_up(n, tile)
    if n_pad != n:
        z = jnp.pad(z, ((0, n_pad - n), (0, 0)))
        lab = jnp.pad(lab, ((0, n_pad - n), (0, 0)))
    nblk = n_pad // tile

    z_bytes = 2 if use_bf16_matmul else 4
    lab_bytes = 2 if binary_labels else 4
    panel_bytes = n_pad * (d * z_bytes + c * lab_bytes)
    if resident_cols is None:
        # Keep the whole column panel VMEM-resident when cheap; this removes
        # the nblk x HBM re-read of the column operand (the old memory bound).
        resident_cols = nblk > 1 and panel_bytes <= (12 << 20)

    if resident_cols:
        z_col_spec = pl.BlockSpec((n_pad, d), lambda i, j: (0, 0))
        lab_col_spec = pl.BlockSpec((n_pad, c), lambda i, j: (0, 0))
        col_vmem = panel_bytes
    else:
        z_col_spec = pl.BlockSpec((tile, d), lambda i, j: (j, 0))
        lab_col_spec = pl.BlockSpec((tile, c), lambda i, j: (j, 0))
        col_vmem = 2 * tile * (d * z_bytes + c * lab_bytes)

    vmem_est = (col_vmem + 2 * tile * (d * z_bytes + c * lab_bytes)
                + 8 * tile * tile * 4 + (2 << 20))
    vmem_limit = int(min(max(vmem_est, 16 << 20), 64 << 20))

    kernel = functools.partial(
        _nt_xent_kernel,
        inv_temp=float(1.0 / temperature),
        n_valid=n, n_pad=n_pad, tile=tile, resident_cols=resident_cols)

    col_reads = 1 if resident_cols else nblk
    cost = pl.CostEstimate(
        flops=int(2 * n_pad * n_pad * (d + c)),
        transcendentals=int(n_pad * n_pad),
        bytes_accessed=int((nblk + col_reads) * n_pad * (d * z_bytes + c * lab_bytes)
                           + 4 * n_pad))

    per_row = pl.pallas_call(
        kernel,
        out_shape=jax.ShapeDtypeStruct((n_pad, 1), jnp.float32),
        grid_spec=pltpu.PrefetchScalarGridSpec(
            num_scalar_prefetch=0,
            grid=(nblk, nblk),
            in_specs=[
                pl.BlockSpec((tile, d), lambda i, j: (i, 0)),   # z, row block
                z_col_spec,                                     # z, column panel/block
                pl.BlockSpec((tile, c), lambda i, j: (i, 0)),   # labels, row block
                lab_col_spec,                                   # labels, column panel/block
            ],
            out_specs=pl.BlockSpec((tile, 1), lambda i, j: (i, 0)),
            scratch_shapes=[pltpu.VMEM((tile, 1), jnp.float32)] * 3,
        ),
        compiler_params=pltpu.CompilerParams(
            dimension_semantics=("parallel", "arbitrary"),
            vmem_limit_bytes=vmem_limit),
        cost_estimate=cost,
    )(z, z, lab, lab)

    # Mean over the N real rows (padded rows are discarded).
    return jnp.mean(per_row[:n, 0])


def nt_xent_reference(z_i, z_j, dist_labels, *, temperature):
    """Pure-JAX reference mirroring the PyTorch forward (world_size == 1)."""
    z = jnp.concatenate([z_i, z_j], axis=0).astype(jnp.float32)
    lab = jnp.concatenate([dist_labels, dist_labels], axis=0).astype(jnp.float32)
    n = z.shape[0]
    z = z / jnp.maximum(jnp.linalg.norm(z, axis=1, keepdims=True), 1e-12)
    sim = jnp.matmul(z, z.T, precision=lax.Precision.HIGHEST) / temperature
    pos = jnp.matmul(lab, lab.T, precision=lax.Precision.HIGHEST)
    off = 1.0 - jnp.eye(n, dtype=jnp.float32)
    pos = pos * off
    denom = jnp.sum(jnp.exp(sim) * off, axis=1)
    positive_sum = jnp.sum(pos, axis=1)
    return jnp.mean(jnp.log(denom) - jnp.sum(sim * pos, axis=1) / positive_sum)


if __name__ == "__main__":
    temperature = 0.5
    feat_dim, num_classes = 32, 16

    # Case 1: single-tile path (batch=8 -> N=16, D=32, C=16), f32 parity mode.
    batch_size = 8
    k1, k2, k3 = jax.random.split(jax.random.PRNGKey(0), 3)
    z_i = jax.random.normal(k1, (batch_size, feat_dim), dtype=jnp.float32)
    z_j = jax.random.normal(k2, (batch_size, feat_dim), dtype=jnp.float32)
    cls = jax.random.randint(k3, (batch_size,), 0, num_classes)
    dist_labels = jax.nn.one_hot(cls, num_classes, dtype=jnp.float32)

    loss = jax.block_until_ready(
        nt_xent_loss(z_i, z_j, dist_labels, temperature=temperature))
    ref = nt_xent_reference(z_i, z_j, dist_labels, temperature=temperature)
    assert jnp.allclose(loss, ref, rtol=1e-5, atol=1e-5), (loss, ref)

    # Case 2: multi-block + padding, resident column panel (batch=20 -> N=40,
    # tile=16 -> 3x3 grid).
    batch_size2 = 20
    k4, k5, k6 = jax.random.split(jax.random.PRNGKey(1), 3)
    z_i2 = jax.random.normal(k4, (batch_size2, feat_dim), dtype=jnp.float32)
    z_j2 = jax.random.normal(k5, (batch_size2, feat_dim), dtype=jnp.float32)
    cls2 = jax.random.randint(k6, (batch_size2,), 0, num_classes)
    dist_labels2 = jax.nn.one_hot(cls2, num_classes, dtype=jnp.float32)

    loss2 = jax.block_until_ready(
        nt_xent_loss(z_i2, z_j2, dist_labels2, temperature=temperature, tile=16))
    ref2 = nt_xent_reference(z_i2, z_j2, dist_labels2, temperature=temperature)
    assert jnp.allclose(loss2, ref2, rtol=1e-5, atol=1e-5), (loss2, ref2)

    # Case 3: same problem, streamed column blocks (forced), same answer.
    loss3 = jax.block_until_ready(
        nt_xent_loss(z_i2, z_j2, dist_labels2, temperature=temperature, tile=16,
                     resident_cols=False))
    assert jnp.allclose(loss3, ref2, rtol=1e-5, atol=1e-5), (loss3, ref2)

    # Case 4: bf16 fast path (documented production path); loose tolerance.
    loss4 = jax.block_until_ready(
        nt_xent_loss(z_i2, z_j2, dist_labels2, temperature=temperature, tile=16,
                     use_bf16_matmul=True))
    assert jnp.allclose(loss4, ref2, rtol=5e-2, atol=5e-2), (loss4, ref2)

    print("KERNEL_OK")
</pallas_src>

<mosaic_0001>
module attributes {stable_mosaic.version = 11 : i64} {
  func.func @_nt_xent_kernel(%arg0: i32, %arg1: i32, %arg2: memref<16x32xf32, #tpu.memory_space<vmem>>, %arg3: memref<16x32xf32, #tpu.memory_space<vmem>>, %arg4: memref<16x16xbf16, #tpu.memory_space<vmem>>, %arg5: memref<16x16xbf16, #tpu.memory_space<vmem>>, %arg6: memref<16x1xf32, #tpu.memory_space<vmem>>, %arg7: memref<16x1xf32, #tpu.memory_space<vmem>>, %arg8: memref<16x1xf32, #tpu.memory_space<vmem>>, %arg9: memref<16x1xf32, #tpu.memory_space<vmem>>) attributes {dimension_semantics = [#tpu.dimension_semantics<parallel>, #tpu.dimension_semantics<arbitrary>], iteration_bounds = array<i64: 1, 1>, scalar_prefetch = 0 : i64, scratch_operands = 3 : i64, tpu.core_type = #tpu.core_type<tc>, window_params = [{transform_indices = @transform_0, window_bounds = array<i64: 16, 32>}, {transform_indices = @transform_1, window_bounds = array<i64: 16, 32>}, {transform_indices = @transform_2, window_bounds = array<i64: 16, 16>}, {transform_indices = @transform_3, window_bounds = array<i64: 16, 16>}, {transform_indices = @transform_4, window_bounds = array<i64: 16, 1>}]} {
    %c0_i32 = arith.constant 0 : i32
    %0 = arith.cmpi eq, %arg1, %c0_i32 : i32
    %1 = arith.extui %0 : i1 to i32
    %c0_i32_0 = arith.constant 0 : i32
    %2 = arith.cmpi ne, %1, %c0_i32_0 : i32
    scf.if %2 {
      %cst_28 = arith.constant 0.000000e+00 : f32
      %34 = vector.broadcast %cst_28 : f32 to vector<16x1xf32>
      %c0_29 = arith.constant 0 : index
      %c0_30 = arith.constant 0 : index
      %35 = vector.load %arg7[%c0_29, %c0_30] : memref<16x1xf32, #tpu.memory_space<vmem>>, vector<16x1xf32>
      tpu.vector_store %arg7[%c0_29, %c0_30], %34 {strides = array<i32>} : memref<16x1xf32, #tpu.memory_space<vmem>>, vector<16x1xf32>,
      %cst_31 = arith.constant 0.000000e+00 : f32
      %36 = vector.broadcast %cst_31 : f32 to vector<16x1xf32>
      %c0_32 = arith.constant 0 : index
      %c0_33 = arith.constant 0 : index
      %37 = vector.load %arg8[%c0_32, %c0_33] : memref<16x1xf32, #tpu.memory_space<vmem>>, vector<16x1xf32>
      tpu.vector_store %arg8[%c0_32, %c0_33], %36 {strides = array<i32>} : memref<16x1xf32, #tpu.memory_space<vmem>>, vector<16x1xf32>,
      %cst_34 = arith.constant 0.000000e+00 : f32
      %38 = vector.broadcast %cst_34 : f32 to vector<16x1xf32>
      %c0_35 = arith.constant 0 : index
      %c0_36 = arith.constant 0 : index
      %39 = vector.load %arg9[%c0_35, %c0_36] : memref<16x1xf32, #tpu.memory_space<vmem>>, vector<16x1xf32>
      tpu.vector_store %arg9[%c0_35, %c0_36], %38 {strides = array<i32>} : memref<16x1xf32, #tpu.memory_space<vmem>>, vector<16x1xf32>,
    } else {
    }
    %c0 = arith.constant 0 : index
    %c0_1 = arith.constant 0 : index
    %3 = vector.load %arg2[%c0, %c0_1] : memref<16x32xf32, #tpu.memory_space<vmem>>, vector<16x32xf32>
    %c0_2 = arith.constant 0 : index
    %c0_3 = arith.constant 0 : index
    %4 = vector.load %arg4[%c0_2, %c0_3] : memref<16x16xbf16, #tpu.memory_space<vmem>>, vector<16x16xbf16>
    %c0_4 = arith.constant 0 : index
    %c0_5 = arith.constant 0 : index
    %5 = vector.load %arg3[%c0_4, %c0_5] : memref<16x32xf32, #tpu.memory_space<vmem>>, vector<16x32xf32>
    %c0_6 = arith.constant 0 : index
    %c0_7 = arith.constant 0 : index
    %6 = vector.load %arg5[%c0_6, %c0_7] : memref<16x16xbf16, #tpu.memory_space<vmem>>, vector<16x16xbf16>
    %cst = arith.constant dense<0.000000e+00> : vector<16x16xf32>
    %7 = tpu.matmul %3, %5, %cst {dimension_numbers = #tpu.dot_dimension_numbers<[1], [1], [0], [0], [0, 0, 1, 0], [], []>, precision = #tpu.contract_precision<fp32>} : vector<16x32xf32>, vector<16x32xf32>, vector<16x16xf32> -> vector<16x16xf32>
    %cst_8 = arith.constant 2.000000e+00 : f32
    %8 = vector.broadcast %cst_8 : f32 to vector<16x16xf32>
    %9 = arith.mulf %7, %8 : vector<16x16xf32>
    %cst_9 = arith.constant dense<0.000000e+00> : vector<16x16xf32>
    %10 = tpu.matmul %4, %6, %cst_9 {dimension_numbers = #tpu.dot_dimension_numbers<[1], [1], [0], [0], [0, 0, 1, 0], [], []>} : vector<16x16xbf16>, vector<16x16xbf16>, vector<16x16xf32> -> vector<16x16xf32>
    %11 = math.exp %9 : vector<16x16xf32>
    %c0_10 = arith.constant 0 : index
    %c0_11 = arith.constant 0 : index
    %12 = vector.load %arg7[%c0_10, %c0_11] : memref<16x1xf32, #tpu.memory_space<vmem>>, vector<16x1xf32>
    %cst_12 = arith.constant dense<0.000000e+00> : vector<16xf32>
    %13 = vector.multi_reduction <add>, %11, %cst_12 [1] : vector<16x16xf32> to vector<16xf32>
    %14 = vector.shape_cast %13 : vector<16xf32> to vector<16x1xf32>
    %15 = arith.addf %12, %14 : vector<16x1xf32>
    %c0_13 = arith.constant 0 : index
    %c0_14 = arith.constant 0 : index
    %16 = vector.load %arg7[%c0_13, %c0_14] : memref<16x1xf32, #tpu.memory_space<vmem>>, vector<16x1xf32>
    tpu.vector_store %arg7[%c0_13, %c0_14], %15 {strides = array<i32>} : memref<16x1xf32, #tpu.memory_space<vmem>>, vector<16x1xf32>,
    %c0_15 = arith.constant 0 : index
    %c0_16 = arith.constant 0 : index
    %17 = vector.load %arg9[%c0_15, %c0_16] : memref<16x1xf32, #tpu.memory_space<vmem>>, vector<16x1xf32>
    %cst_17 = arith.constant dense<0.000000e+00> : vector<16xf32>
    %18 = vector.multi_reduction <add>, %10, %cst_17 [1] : vector<16x16xf32> to vector<16xf32>
    %19 = vector.shape_cast %18 : vector<16xf32> to vector<16x1xf32>
    %20 = arith.addf %17, %19 : vector<16x1xf32>
    %c0_18 = arith.constant 0 : index
    %c0_19 = arith.constant 0 : index
    %21 = vector.load %arg9[%c0_18, %c0_19] : memref<16x1xf32, #tpu.memory_space<vmem>>, vector<16x1xf32>
    tpu.vector_store %arg9[%c0_18, %c0_19], %20 {strides = array<i32>} : memref<16x1xf32, #tpu.memory_space<vmem>>, vector<16x1xf32>,
    %c0_20 = arith.constant 0 : index
    %c0_21 = arith.constant 0 : index
    %22 = vector.load %arg8[%c0_20, %c0_21] : memref<16x1xf32, #tpu.memory_space<vmem>>, vector<16x1xf32>
    %23 = arith.mulf %9, %10 : vector<16x16xf32>
    %cst_22 = arith.constant dense<0.000000e+00> : vector<16xf32>
    %24 = vector.multi_reduction <add>, %23, %cst_22 [1] : vector<16x16xf32> to vector<16xf32>
    %25 = vector.shape_cast %24 : vector<16xf32> to vector<16x1xf32>
    %26 = arith.addf %22, %25 : vector<16x1xf32>
    %c0_23 = arith.constant 0 : index
    %c0_24 = arith.constant 0 : index
    %27 = vector.load %arg8[%c0_23, %c0_24] : memref<16x1xf32, #tpu.memory_space<vmem>>, vector<16x1xf32>
    tpu.vector_store %arg8[%c0_23, %c0_24], %26 {strides = array<i32>} : memref<16x1xf32, #tpu.memory_space<vmem>>, vector<16x1xf32>,
    %28 = arith.cmpi eq, %arg0, %arg1 : i32
    %29 = arith.extui %28 : i1 to i32
    %c0_i32_25 = arith.constant 0 : i32
    %30 = arith.cmpi ne, %29, %c0_i32_25 : i32
    scf.if %30 {
      %34 = arith.extf %4 : vector<16x16xbf16> to vector<16x16xf32>
      %35 = arith.mulf %3, %3 : vector<16x32xf32>
      %cst_28 = arith.constant dense<0.000000e+00> : vector<16xf32>
      %36 = vector.multi_reduction <add>, %35, %cst_28 [1] : vector<16x32xf32> to vector<16xf32>
      %37 = vector.shape_cast %36 : vector<16xf32> to vector<16x1xf32>
      %cst_29 = arith.constant 2.000000e+00 : f32
      %38 = vector.broadcast %cst_29 : f32 to vector<16x1xf32>
      %39 = arith.mulf %37, %38 : vector<16x1xf32>
      %40 = arith.mulf %34, %34 : vector<16x16xf32>
      %cst_30 = arith.constant dense<0.000000e+00> : vector<16xf32>
      %41 = vector.multi_reduction <add>, %40, %cst_30 [1] : vector<16x16xf32> to vector<16xf32>
      %42 = vector.shape_cast %41 : vector<16xf32> to vector<16x1xf32>
      %c0_31 = arith.constant 0 : index
      %c0_32 = arith.constant 0 : index
      %43 = vector.load %arg7[%c0_31, %c0_32] : memref<16x1xf32, #tpu.memory_space<vmem>>, vector<16x1xf32>
      %44 = math.exp %39 : vector<16x1xf32>
      %45 = arith.subf %43, %44 : vector<16x1xf32>
      %c0_33 = arith.constant 0 : index
      %c0_34 = arith.constant 0 : index
      %46 = vector.load %arg7[%c0_33, %c0_34] : memref<16x1xf32, #tpu.memory_space<vmem>>, vector<16x1xf32>
      tpu.vector_store %arg7[%c0_33, %c0_34], %45 {strides = array<i32>} : memref<16x1xf32, #tpu.memory_space<vmem>>, vector<16x1xf32>,
      %c0_35 = arith.constant 0 : index
      %c0_36 = arith.constant 0 : index
      %47 = vector.load %arg9[%c0_35, %c0_36] : memref<16x1xf32, #tpu.memory_space<vmem>>, vector<16x1xf32>
      %48 = arith.subf %47, %42 : vector<16x1xf32>
      %c0_37 = arith.constant 0 : index
      %c0_38 = arith.constant 0 : index
      %49 = vector.load %arg9[%c0_37, %c0_38] : memref<16x1xf32, #tpu.memory_space<vmem>>, vector<16x1xf32>
      tpu.vector_store %arg9[%c0_37, %c0_38], %48 {strides = array<i32>} : memref<16x1xf32, #tpu.memory_space<vmem>>, vector<16x1xf32>,
      %c0_39 = arith.constant 0 : index
      %c0_40 = arith.constant 0 : index
      %50 = vector.load %arg8[%c0_39, %c0_40] : memref<16x1xf32, #tpu.memory_space<vmem>>, vector<16x1xf32>
      %51 = arith.mulf %39, %42 : vector<16x1xf32>
      %52 = arith.subf %50, %51 : vector<16x1xf32>
      %c0_41 = arith.constant 0 : index
      %c0_42 = arith.constant 0 : index
      %53 = vector.load %arg8[%c0_41, %c0_42] : memref<16x1xf32, #tpu.memory_space<vmem>>, vector<16x1xf32>
      tpu.vector_store %arg8[%c0_41, %c0_42], %52 {strides = array<i32>} : memref<16x1xf32, #tpu.memory_space<vmem>>, vector<16x1xf32>,
    } else {
    }
    %c0_i32_26 = arith.constant 0 : i32
    %31 = arith.cmpi eq, %arg1, %c0_i32_26 : i32
    %32 = arith.extui %31 : i1 to i32
    %c0_i32_27 = arith.constant 0 : i32
    %33 = arith.cmpi ne, %32, %c0_i32_27 : i32
    scf.if %33 {
      %c0_28 = arith.constant 0 : index
      %c0_29 = arith.constant 0 : index
      %34 = vector.load %arg7[%c0_28, %c0_29] : memref<16x1xf32, #tpu.memory_space<vmem>>, vector<16x1xf32>
      %35 = math.log %34 : vector<16x1xf32>
      %c0_30 = arith.constant 0 : index
      %c0_31 = arith.constant 0 : index
      %36 = vector.load %arg8[%c0_30, %c0_31] : memref<16x1xf32, #tpu.memory_space<vmem>>, vector<16x1xf32>
      %c0_32 = arith.constant 0 : index
      %c0_33 = arith.constant 0 : index
      %37 = vector.load %arg9[%c0_32, %c0_33] : memref<16x1xf32, #tpu.memory_space<vmem>>, vector<16x1xf32>
      %38 = arith.divf %36, %37 : vector<16x1xf32>
      %39 = arith.subf %35, %38 : vector<16x1xf32>
      %c0_34 = arith.constant 0 : index
      %c0_35 = arith.constant 0 : index
      %40 = vector.load %arg6[%c0_34, %c0_35] : memref<16x1xf32, #tpu.memory_space<vmem>>, vector<16x1xf32>
      tpu.vector_store %arg6[%c0_34, %c0_35], %39 {strides = array<i32>} : memref<16x1xf32, #tpu.memory_space<vmem>>, vector<16x1xf32>,
    } else {
    }
    return
  }
  func.func @transform_0(%arg0: i32, %arg1: i32) -> (i32, i32) {
    %c0_i32 = arith.constant 0 : i32
    %c0_i32_0 = arith.constant 0 : i32
    return %arg0, %c0_i32 : i32, i32
  }
  func.func @transform_1(%arg0: i32, %arg1: i32) -> (i32, i32) {
    %c0_i32 = arith.constant 0 : i32
    %c0_i32_0 = arith.constant 0 : i32
    return %arg1, %c0_i32 : i32, i32
  }
  func.func @transform_2(%arg0: i32, %arg1: i32) -> (i32, i32) {
    %c0_i32 = arith.constant 0 : i32
    %c0_i32_0 = arith.constant 0 : i32
    return %arg0, %c0_i32 : i32, i32
  }
  func.func @transform_3(%arg0: i32, %arg1: i32) -> (i32, i32) {
    %c0_i32 = arith.constant 0 : i32
    %c0_i32_0 = arith.constant 0 : i32
    return %arg1, %c0_i32 : i32, i32
  }
  func.func @transform_4(%arg0: i32, %arg1: i32) -> (i32, i32) {
    %c0_i32 = arith.constant 0 : i32
    %c0_i32_0 = arith.constant 0 : i32
    return %arg0, %c0_i32 : i32, i32
  }
}

</mosaic_0001>

<llo_original>
// kernel: tpu_custom_call.1
$region0: #{tpu_custom_call.1}
  #allocation0 [shape = 'u32[]', space=smem, size = 0x4, offset = 0x4, fixed_abs, tag = 'smem constant byte address 0x4 - core index']
  #allocation1 [shape = 'u32[144,128]{1,0:T(1,128)}', space=vmem, size = 0x12000, scoped, tag = 'internal scratch']
  #allocation2 [shape = 'f32[16,1]{1,0:T(8,128)}', space=vmem, size = 0x2000, scoped, tag = 'scratch operand']
  #allocation3 [shape = 'f32[16,1]{1,0:T(8,128)}', space=vmem, size = 0x2000, scoped, tag = 'scratch operand']
  #allocation4 [shape = 'f32[16,1]{1,0:T(8,128)}', space=vmem, size = 0x2000, scoped, tag = 'scratch operand']
  %s0 = inlined_call_operand.hbm [shape: f32[16,32], index: 0, kind: input, shape index: {}]
  %s1 = inlined_call_operand.hbm [shape: f32[16,32], index: 1, kind: input, shape index: {}]
  %s2 = inlined_call_operand.hbm [shape: bf16[16,16], index: 2, kind: input, shape index: {}]
  %s3 = inlined_call_operand.vmem [shape: bf16[16,16], index: 3, kind: input, shape index: {}]
  %s4 = inlined_call_operand.vmem [shape: f32[16,1], index: 4, kind: output, shape index: {}]
  %s5 = sld [smem:[#allocation0]]
  $region50: #{tpu_custom_call.1} parent=0
    _
  %s7 = ssub.s32 1, %s5
  %s8 = scalar_select 0, %s7, %s5
  $region1: #{tpu_custom_call.1} parent=0
    #allocation5 [shape = 'u8[8192]{0}', space=vmem, size = 0x2000, scoped, tag = 'input window, operand 0, single buffered']
    #allocation6 [shape = 's32[1]{0}', space=sflag, size = 0x4, scoped, tag = 'scoped memory for tpu_custom_call.1']
    #allocation7 [shape = 'u8[8192]{0}', space=vmem, size = 0x2000, scoped, tag = 'input window, operand 1, single buffered']
    #allocation8 [shape = 's32[1]{0}', space=sflag, size = 0x4, scoped, tag = 'scoped memory for tpu_custom_call.1']
    #allocation9 [shape = 'u8[4096]{0}', space=vmem, size = 0x1000, scoped, tag = 'input window, operand 2, single buffered']
    %9 = vsyncpa [#allocation6], 0
    %10 = vsyncpa [#allocation8], 0
    // Predicated region
    $region2: #{tpu_custom_call.1} parent=1 // pred_check
      _
    $region3: #{tpu_custom_call.1} parent=1 // pred_check_branch
      %12 = sbr.rel (0) target = $region5
    $region4: #{tpu_custom_call.1} parent=1 // pred_region
      %s14 = ssub.s32 256, 256
      %15 = vsyncadd [#allocation6], %s14
      %s16 = sshll.u32 [#allocation5], 4
      %s17 = int_to_ptr.vmem [resolvable:$true] %s16
      %22 = dma.hbm_to_vmem [thread:$0]  %s0, 256, %s17, [#allocation6], 128, 128, 8
    $region5: #{tpu_custom_call.1} parent=1 // pred_fallthru
      _
    // Predicated region
    $region6: #{tpu_custom_call.1} parent=1 // pred_check
      _
    $region7: #{tpu_custom_call.1} parent=1 // pred_check_branch
      %24 = sbr.rel (0) target = $region9
    $region8: #{tpu_custom_call.1} parent=1 // pred_region
      %s26 = ssub.s32 256, 256
      %27 = vsyncadd [#allocation8], %s26
      %s28 = sshll.u32 [#allocation7], 4
      %s29 = int_to_ptr.vmem [resolvable:$true] %s28
      %34 = dma.hbm_to_vmem [thread:$0]  %s1, 256, %s29, [#allocation8], 128, 128, 8
    $region9: #{tpu_custom_call.1} parent=1 // pred_fallthru
      _
    // Predicated region
    $region10: #{tpu_custom_call.1} parent=1 // pred_check
      _
    $region11: #{tpu_custom_call.1} parent=1 // pred_check_branch
      %36 = sbr.rel (0) target = $region13
    $region12: #{tpu_custom_call.1} parent=1 // pred_region
      %s38 = ssub.s32 128, 128
      %39 = vsyncadd [#allocation8], %s38
      %s40 = sshll.u32 [#allocation9], 4
      %s41 = int_to_ptr.vmem [resolvable:$true] %s40
      %46 = dma.hbm_to_vmem [thread:$0]  %s2, 128, %s41, [#allocation8], 64, 64, 4
    $region13: #{tpu_custom_call.1} parent=1 // pred_fallthru
      _
    // Predicated region
    $region14: #{tpu_custom_call.1} parent=1 // pred_check
      _
    $region15: #{tpu_custom_call.1} parent=1 // pred_check_branch
      %48 = sbr.rel (0) target = $region17
    $region16: #{tpu_custom_call.1} parent=1 // pred_region
      _
    $region17: #{tpu_custom_call.1} parent=1 // pred_fallthru
      _
    // Predicated region
    $region18: #{tpu_custom_call.1} parent=1 // pred_check
      _
    $region19: #{tpu_custom_call.1} parent=1 // pred_check_branch
      %50 = sbr.rel (0) target = $region21
    $region20: #{tpu_custom_call.1} parent=1 // pred_region
      %51 = dma.done [#allocation6], 256
    $region21: #{tpu_custom_call.1} parent=1 // pred_fallthru
      _
    // Predicated region
    $region22: #{tpu_custom_call.1} parent=1 // pred_check
      _
    $region23: #{tpu_custom_call.1} parent=1 // pred_check_branch
      %53 = sbr.rel (0) target = $region25
    $region24: #{tpu_custom_call.1} parent=1 // pred_region
      %54 = dma.done [#allocation8], 256
    $region25: #{tpu_custom_call.1} parent=1 // pred_fallthru
      _
    // Predicated region
    $region26: #{tpu_custom_call.1} parent=1 // pred_check
      _
    $region27: #{tpu_custom_call.1} parent=1 // pred_check_branch
      %56 = sbr.rel (0) target = $region29
    $region28: #{tpu_custom_call.1} parent=1 // pred_region
      %57 = dma.done [#allocation8], 128
    $region29: #{tpu_custom_call.1} parent=1 // pred_fallthru
      _
    %p59 = scmp.eq.s32.totalorder 0, 0
    // Predicated region
    $region30: #{tpu_custom_call.1} parent=1 // pred_check
      %p60 = pneg %p59
    $region31: #{tpu_custom_call.1} parent=1 // pred_check_branch
      %62 = sbr.rel (%p60) target = $region33
    $region32: #{tpu_custom_call.1} parent=1 // pred_region
      %vm63 = vcmask 7168
      %64 = vst.msk [vmem:[#allocation2] sm:$0xff] %vm63, 0.0
      %65 = vst.msk [vmem:[#allocation2 + $0x8] sm:$0xff] %vm63, 0.0
      %66 = vst.msk [vmem:[#allocation3] sm:$0xff] %vm63, 0.0
      %67 = vst.msk [vmem:[#allocation3 + $0x8] sm:$0xff] %vm63, 0.0
      %68 = vst.msk [vmem:[#allocation4] sm:$0xff] %vm63, 0.0
      %69 = vst.msk [vmem:[#allocation4 + $0x8] sm:$0xff] %vm63, 0.0
    $region33: #{tpu_custom_call.1} parent=1 // pred_fallthru
      _
    %v70 = vld [vmem:[#allocation5] sm:$0xff]
    %v71 = vld [vmem:[#allocation5 + $0x8] sm:$0xff]
    %v72 = vld [vmem:[#allocation9] sm:$0xf]
    %v73 = vld [vmem:[#allocation9 + $0x4] sm:$0xf]
    %v74 = vld [vmem:[#allocation7] sm:$0xff]
    %v75 = vld [vmem:[#allocation7 + $0x8] sm:$0xff]
    %v76 = vld [vmem:[%s3] sm:$0xf]
    %v77 = vld [vmem:[%s3 + $0x4] sm:$0xf]
    %vm78 = vcmask 261120
    %v80 = vsel %vm78, %v70, 0
    %v83 = vsel %vm78, %v71, 0
    %v86 = vsel %vm78, %v74, 0
    %v89 = vsel %vm78, %v75, 0
    %91 = vmatprep.subr.mxu0 0.0
    %v92 = vand.u32 %v86, 4294901760
    %93 = vmatpush1.xpose.msra.mxu0 %v92
    %94 = vmatprep.subr.mxu0 0.0
    %v95 = vand.u32 %v89, 4294901760
    %96 = vmatpush1.xpose.msra.mxu0 %v95
    %97 = vmatprep.subr.mxu0 0.0
    %98 = vmatpush1.xpose.msra.mxu0 0.0
    %99 = vmatprep.subr.mxu0 0.0
    %100 = vmatpush1.xpose.msra.mxu0 0.0
    %101 = vmatprep.subr.mxu0 0.0
    %102 = vmatpush1.xpose.msra.mxu0 0.0
    %103 = vmatprep.subr.mxu0 0.0
    %104 = vmatpush1.xpose.msra.mxu0 0.0
    %105 = vmatprep.subr.mxu0 0.0
    %106 = vmatpush1.xpose.msra.mxu0 0.0
    %107 = vmatprep.subr.mxu0 0.0
    %108 = vmatpush1.xpose.msra.mxu0 0.0
    %109 = vmatprep.subr.mxu0 0.0
    %110 = vmatpush1.xpose.msra.mxu0 0.0
    %111 = vmatprep.subr.mxu0 0.0
    %112 = vmatpush1.xpose.msra.mxu0 0.0
    %113 = vmatprep.subr.mxu0 0.0
    %114 = vmatpush1.xpose.msra.mxu0 0.0
    %115 = vmatprep.subr.mxu0 0.0
    %116 = vmatpush1.xpose.msra.mxu0 0.0
    %117 = vmatprep.subr.mxu0 0.0
    %118 = vmatpush1.xpose.msra.mxu0 0.0
    %119 = vmatprep.subr.mxu0 0.0
    %120 = vmatpush1.xpose.msra.mxu0 0.0
    %121 = vmatprep.subr.mxu0 0.0
    %122 = vmatpush1.xpose.msra.mxu0 0.0
    %123 = vmatprep.subr.mxu0 0.0
    %124 = vmatpush1.xpose.msra.mxu0 0.0
    %125 = vmatprep.subr.mxu0 0.0
    %126 = vmatpush1.xpose.msra.mxu0 0.0
    %127 = vmatprep.subr.mxu0 0.0
    %128 = vmatpush1.xpose.msra.mxu0 0.0
    %129 = vmatprep.subr.mxu0 0.0
    %130 = vmatpush1.xpose.msra.mxu0 0.0
    %131 = vmatprep.subr.mxu0 0.0
    %132 = vmatpush1.xpose.msra.mxu0 0.0
    %133 = vmatprep.subr.mxu0 0.0
    %134 = vmatpush1.xpose.msra.mxu0 0.0
    %135 = vmatprep.subr.mxu0 0.0
    %136 = vmatpush1.xpose.msra.mxu0 0.0
    %137 = vmatprep.subr.mxu0 0.0
    %138 = vmatpush1.xpose.msra.mxu0 0.0
    %139 = vmatprep.subr.mxu0 0.0
    %140 = vmatpush1.xpose.msra.mxu0 0.0
    %141 = vmatprep.subr.mxu0 0.0
    %142 = vmatpush1.xpose.msra.mxu0 0.0
    %143 = vmatprep.subr.mxu0 0.0
    %144 = vmatpush1.xpose.msra.mxu0 0.0
    %145 = vmatprep.subr.mxu0 0.0
    %146 = vmatpush1.xpose.msra.mxu0 0.0
    %147 = vmatprep.subr.mxu0 0.0
    %148 = vmatpush1.xpose.msra.mxu0 0.0
    %149 = vmatprep.subr.mxu0 0.0
    %150 = vmatpush1.xpose.msra.mxu0 0.0
    %151 = vmatprep.subr.mxu0 0.0
    %152 = vmatpush1.xpose.msra.mxu0 0.0
    %153 = vmatprep.subr.mxu0 0.0
    %154 = vmatpush1.xpose.msra.mxu0 0.0
    %155 = vmatprep.subr.mxu0 0.0
    %156 = vmatpush1.xpose.msra.mxu0 0.0
    %157 = vmatprep.mubr.f32.mxu0 0.0
    %v158 = vand.u32 %v80, 4294901760
    %v159 = vsub.f32 %v80, %v158
    %v160 = vand.u32 %v159, 4294901760
    %v161 = vsub.f32 %v159, %v160
    %v162 = vand.u32 %v161, 4294901760
    %163 = vmatmul.mubr.f32.gmra.mrb[0].mxu0 %v162
    %v164 = vpop.f32.mrb[0].mxu0
    %v165 = vadd.f32 0.0, %v164
    %v166 = vpop.f32.mrb[0].mxu0
    %167 = vmatprep.mubr.f32.mxu0 0.0
    %v168 = vand.u32 %v83, 4294901760
    %v169 = vsub.f32 %v83, %v168
    %v170 = vand.u32 %v169, 4294901760
    %v171 = vsub.f32 %v169, %v170
    %v172 = vand.u32 %v171, 4294901760
    %173 = vmatmul.mubr.f32.gmra.mrb[0].mxu0 %v172
    %v174 = vpop.f32.mrb[0].mxu0
    %v175 = vadd.f32 0.0, %v174
    %v176 = vpop.f32.mrb[0].mxu0
    %177 = vdwg.mxu0
    %178 = vmatprep.subr.mxu0 0.0
    %v179 = vand.u32 %v86, 4294901760
    %v180 = vsub.f32 %v86, %v179
    %v181 = vand.u32 %v180, 4294901760
    %v182 = vsub.f32 %v180, %v181
    %v183 = vand.u32 %v182, 4294901760
    %184 = vmatpush1.xpose.msra.mxu0 %v183
    %185 = vmatprep.subr.mxu0 0.0
    %v186 = vand.u32 %v89, 4294901760
    %v187 = vsub.f32 %v89, %v186
    %v188 = vand.u32 %v187, 4294901760
    %v189 = vsub.f32 %v187, %v188
    %v190 = vand.u32 %v189, 4294901760
    %191 = vmatpush1.xpose.msra.mxu0 %v190
    %192 = vmatprep.subr.mxu0 0.0
    %193 = vmatpush1.xpose.msra.mxu0 0.0
    %194 = vmatprep.subr.mxu0 0.0
    %195 = vmatpush1.xpose.msra.mxu0 0.0
    %196 = vmatprep.subr.mxu0 0.0
    %197 = vmatpush1.xpose.msra.mxu0 0.0
    %198 = vmatprep.subr.mxu0 0.0
    %199 = vmatpush1.xpose.msra.mxu0 0.0
    %200 = vmatprep.subr.mxu0 0.0
    %201 = vmatpush1.xpose.msra.mxu0 0.0
    %202 = vmatprep.subr.mxu0 0.0
    %203 = vmatpush1.xpose.msra.mxu0 0.0
    %204 = vmatprep.subr.mxu0 0.0
    %205 = vmatpush1.xpose.msra.mxu0 0.0
    %206 = vmatprep.subr.mxu0 0.0
    %207 = vmatpush1.xpose.msra.mxu0 0.0
    %208 = vmatprep.subr.mxu0 0.0
    %209 = vmatpush1.xpose.msra.mxu0 0.0
    %210 = vmatprep.subr.mxu0 0.0
    %211 = vmatpush1.xpose.msra.mxu0 0.0
    %212 = vmatprep.subr.mxu0 0.0
    %213 = vmatpush1.xpose.msra.mxu0 0.0
    %214 = vmatprep.subr.mxu0 0.0
    %215 = vmatpush1.xpose.msra.mxu0 0.0
    %216 = vmatprep.subr.mxu0 0.0
    %217 = vmatpush1.xpose.msra.mxu0 0.0
    %218 = vmatprep.subr.mxu0 0.0
    %219 = vmatpush1.xpose.msra.mxu0 0.0
    %220 = vmatprep.subr.mxu0 0.0
    %221 = vmatpush1.xpose.msra.mxu0 0.0
    %222 = vmatprep.subr.mxu0 0.0
    %223 = vmatpush1.xpose.msra.mxu0 0.0
    %224 = vmatprep.subr.mxu0 0.0
    %225 = vmatpush1.xpose.msra.mxu0 0.0
    %226 = vmatprep.subr.mxu0 0.0
    %227 = vmatpush1.xpose.msra.mxu0 0.0
    %228 = vmatprep.subr.mxu0 0.0
    %229 = vmatpush1.xpose.msra.mxu0 0.0
    %230 = vmatprep.subr.mxu0 0.0
    %231 = vmatpush1.xpose.msra.mxu0 0.0
    %232 = vmatprep.subr.mxu0 0.0
    %233 = vmatpush1.xpose.msra.mxu0 0.0
    %234 = vmatprep.subr.mxu0 0.0
    %235 = vmatpush1.xpose.msra.mxu0 0.0
    %236 = vmatprep.subr.mxu0 0.0
    %237 = vmatpush1.xpose.msra.mxu0 0.0
    %238 = vmatprep.subr.mxu0 0.0
    %239 = vmatpush1.xpose.msra.mxu0 0.0
    %240 = vmatprep.subr.mxu0 0.0
    %241 = vmatpush1.xpose.msra.mxu0 0.0
    %242 = vmatprep.subr.mxu0 0.0
    %243 = vmatpush1.xpose.msra.mxu0 0.0
    %244 = vmatprep.subr.mxu0 0.0
    %245 = vmatpush1.xpose.msra.mxu0 0.0
    %246 = vmatprep.subr.mxu0 0.0
    %247 = vmatpush1.xpose.msra.mxu0 0.0
    %248 = vmatprep.subr.mxu0 0.0
    %249 = vmatpush1.xpose.msra.mxu0 0.0
    %250 = vmatprep.subr.mxu0 0.0
    %251 = vmatpush1.xpose.msra.mxu0 0.0
    %252 = vmatprep.mubr.f32.mxu0 0.0
    %v253 = vand.u32 %v80, 4294901760
    %254 = vmatmul.mubr.f32.gmra.mrb[0].mxu0 %v253
    %v255 = vpop.f32.mrb[0].mxu0
    %v256 = vadd.f32 %v165, %v255
    %v257 = vpop.f32.mrb[0].mxu0
    %258 = vmatprep.mubr.f32.mxu0 0.0
    %v259 = vand.u32 %v83, 4294901760
    %260 = vmatmul.mubr.f32.gmra.mrb[0].mxu0 %v259
    %v261 = vpop.f32.mrb[0].mxu0
    %v262 = vadd.f32 %v175, %v261
    %v263 = vpop.f32.mrb[0].mxu0
    %264 = vdwg.mxu0
    %265 = vmatprep.subr.mxu0 0.0
    %v266 = vand.u32 %v86, 4294901760
    %v267 = vsub.f32 %v86, %v266
    %268 = vmatpush1.xpose.msra.mxu0 %v267
    %269 = vmatprep.subr.mxu0 0.0
    %v270 = vand.u32 %v89, 4294901760
    %v271 = vsub.f32 %v89, %v270
    %272 = vmatpush1.xpose.msra.mxu0 %v271
    %273 = vmatprep.subr.mxu0 0.0
    %274 = vmatpush1.xpose.msra.mxu0 0.0
    %275 = vmatprep.subr.mxu0 0.0
    %276 = vmatpush1.xpose.msra.mxu0 0.0
    %277 = vmatprep.subr.mxu0 0.0
    %278 = vmatpush1.xpose.msra.mxu0 0.0
    %279 = vmatprep.subr.mxu0 0.0
    %280 = vmatpush1.xpose.msra.mxu0 0.0
    %281 = vmatprep.subr.mxu0 0.0
    %282 = vmatpush1.xpose.msra.mxu0 0.0
    %283 = vmatprep.subr.mxu0 0.0
    %284 = vmatpush1.xpose.msra.mxu0 0.0
    %285 = vmatprep.subr.mxu0 0.0
    %286 = vmatpush1.xpose.msra.mxu0 0.0
    %287 = vmatprep.subr.mxu0 0.0
    %288 = vmatpush1.xpose.msra.mxu0 0.0
    %289 = vmatprep.subr.mxu0 0.0
    %290 = vmatpush1.xpose.msra.mxu0 0.0
    %291 = vmatprep.subr.mxu0 0.0
    %292 = vmatpush1.xpose.msra.mxu0 0.0
    %293 = vmatprep.subr.mxu0 0.0
    %294 = vmatpush1.xpose.msra.mxu0 0.0
    %295 = vmatprep.subr.mxu0 0.0
    %296 = vmatpush1.xpose.msra.mxu0 0.0
    %297 = vmatprep.subr.mxu0 0.0
    %298 = vmatpush1.xpose.msra.mxu0 0.0
    %299 = vmatprep.subr.mxu0 0.0
    %300 = vmatpush1.xpose.msra.mxu0 0.0
    %301 = vmatprep.subr.mxu0 0.0
    %302 = vmatpush1.xpose.msra.mxu0 0.0
    %303 = vmatprep.subr.mxu0 0.0
    %304 = vmatpush1.xpose.msra.mxu0 0.0
    %305 = vmatprep.subr.mxu0 0.0
    %306 = vmatpush1.xpose.msra.mxu0 0.0
    %307 = vmatprep.subr.mxu0 0.0
    %308 = vmatpush1.xpose.msra.mxu0 0.0
    %309 = vmatprep.subr.mxu0 0.0
    %310 = vmatpush1.xpose.msra.mxu0 0.0
    %311 = vmatprep.subr.mxu0 0.0
    %312 = vmatpush1.xpose.msra.mxu0 0.0
    %313 = vmatprep.subr.mxu0 0.0
    %314 = vmatpush1.xpose.msra.mxu0 0.0
    %315 = vmatprep.subr.mxu0 0.0
    %316 = vmatpush1.xpose.msra.mxu0 0.0
    %317 = vmatprep.subr.mxu0 0.0
    %318 = vmatpush1.xpose.msra.mxu0 0.0
    %319 = vmatprep.subr.mxu0 0.0
    %320 = vmatpush1.xpose.msra.mxu0 0.0
    %321 = vmatprep.subr.mxu0 0.0
    %322 = vmatpush1.xpose.msra.mxu0 0.0
    %323 = vmatprep.subr.mxu0 0.0
    %324 = vmatpush1.xpose.msra.mxu0 0.0
    %325 = vmatprep.subr.mxu0 0.0
    %326 = vmatpush1.xpose.msra.mxu0 0.0
    %327 = vmatprep.subr.mxu0 0.0
    %328 = vmatpush1.xpose.msra.mxu0 0.0
    %329 = vmatprep.subr.mxu0 0.0
    %330 = vmatpush1.xpose.msra.mxu0 0.0
    %331 = vmatprep.subr.mxu0 0.0
    %332 = vmatpush1.xpose.msra.mxu0 0.0
    %333 = vmatprep.mubr.f32.mxu0 0.0
    %v334 = vand.u32 %v80, 4294901760
    %v335 = vsub.f32 %v80, %v334
    %336 = vmatmul.mubr.f32.gmra.mrb[0].mxu0 %v335
    %v337 = vpop.f32.mrb[0].mxu0
    %v338 = vadd.f32 %v256, %v337
    %v339 = vpop.f32.mrb[0].mxu0
    %340 = vmatprep.mubr.f32.mxu0 0.0
    %v341 = vand.u32 %v83, 4294901760
    %v342 = vsub.f32 %v83, %v341
    %343 = vmatmul.mubr.f32.gmra.mrb[0].mxu0 %v342
    %v344 = vpop.f32.mrb[0].mxu0
    %v345 = vadd.f32 %v262, %v344
    %v346 = vpop.f32.mrb[0].mxu0
    %347 = vdwg.mxu0
    %348 = vmatprep.subr.mxu0 0.0
    %v349 = vand.u32 %v86, 4294901760
    %350 = vmatpush1.xpose.msra.mxu0 %v349
    %351 = vmatprep.subr.mxu0 0.0
    %v352 = vand.u32 %v89, 4294901760
    %353 = vmatpush1.xpose.msra.mxu0 %v352
    %354 = vmatprep.subr.mxu0 0.0
    %355 = vmatpush1.xpose.msra.mxu0 0.0
    %356 = vmatprep.subr.mxu0 0.0
    %357 = vmatpush1.xpose.msra.mxu0 0.0
    %358 = vmatprep.subr.mxu0 0.0
    %359 = vmatpush1.xpose.msra.mxu0 0.0
    %360 = vmatprep.subr.mxu0 0.0
    %361 = vmatpush1.xpose.msra.mxu0 0.0
    %362 = vmatprep.subr.mxu0 0.0
    %363 = vmatpush1.xpose.msra.mxu0 0.0
    %364 = vmatprep.subr.mxu0 0.0
    %365 = vmatpush1.xpose.msra.mxu0 0.0
    %366 = vmatprep.subr.mxu0 0.0
    %367 = vmatpush1.xpose.msra.mxu0 0.0
    %368 = vmatprep.subr.mxu0 0.0
    %369 = vmatpush1.xpose.msra.mxu0 0.0
    %370 = vmatprep.subr.mxu0 0.0
    %371 = vmatpush1.xpose.msra.mxu0 0.0
    %372 = vmatprep.subr.mxu0 0.0
    %373 = vmatpush1.xpose.msra.mxu0 0.0
    %374 = vmatprep.subr.mxu0 0.0
    %375 = vmatpush1.xpose.msra.mxu0 0.0
    %376 = vmatprep.subr.mxu0 0.0
    %377 = vmatpush1.xpose.msra.mxu0 0.0
    %378 = vmatprep.subr.mxu0 0.0
    %379 = vmatpush1.xpose.msra.mxu0 0.0
    %380 = vmatprep.subr.mxu0 0.0
    %381 = vmatpush1.xpose.msra.mxu0 0.0
    %382 = vmatprep.subr.mxu0 0.0
    %383 = vmatpush1.xpose.msra.mxu0 0.0
    %384 = vmatprep.subr.mxu0 0.0
    %385 = vmatpush1.xpose.msra.mxu0 0.0
    %386 = vmatprep.subr.mxu0 0.0
    %387 = vmatpush1.xpose.msra.mxu0 0.0
    %388 = vmatprep.subr.mxu0 0.0
    %389 = vmatpush1.xpose.msra.mxu0 0.0
    %390 = vmatprep.subr.mxu0 0.0
    %391 = vmatpush1.xpose.msra.mxu0 0.0
    %392 = vmatprep.subr.mxu0 0.0
    %393 = vmatpush1.xpose.msra.mxu0 0.0
    %394 = vmatprep.subr.mxu0 0.0
    %395 = vmatpush1.xpose.msra.mxu0 0.0
    %396 = vmatprep.subr.mxu0 0.0
    %397 = vmatpush1.xpose.msra.mxu0 0.0
    %398 = vmatprep.subr.mxu0 0.0
    %399 = vmatpush1.xpose.msra.mxu0 0.0
    %400 = vmatprep.subr.mxu0 0.0
    %401 = vmatpush1.xpose.msra.mxu0 0.0
    %402 = vmatprep.subr.mxu0 0.0
    %403 = vmatpush1.xpose.msra.mxu0 0.0
    %404 = vmatprep.subr.mxu0 0.0
    %405 = vmatpush1.xpose.msra.mxu0 0.0
    %406 = vmatprep.subr.mxu0 0.0
    %407 = vmatpush1.xpose.msra.mxu0 0.0
    %408 = vmatprep.subr.mxu0 0.0
    %409 = vmatpush1.xpose.msra.mxu0 0.0
    %410 = vmatprep.subr.mxu0 0.0
    %411 = vmatpush1.xpose.msra.mxu0 0.0
    %412 = vmatprep.subr.mxu0 0.0
    %413 = vmatpush1.xpose.msra.mxu0 0.0
    %414 = vmatprep.mubr.f32.mxu0 0.0
    %v415 = vand.u32 %v80, 4294901760
    %v416 = vsub.f32 %v80, %v415
    %v417 = vand.u32 %v416, 4294901760
    %418 = vmatmul.mubr.f32.gmra.mrb[0].mxu0 %v417
    %v419 = vpop.f32.mrb[0].mxu0
    %v420 = vadd.f32 %v338, %v419
    %v421 = vpop.f32.mrb[0].mxu0
    %422 = vmatprep.mubr.f32.mxu0 0.0
    %v423 = vand.u32 %v83, 4294901760
    %v424 = vsub.f32 %v83, %v423
    %v425 = vand.u32 %v424, 4294901760
    %426 = vmatmul.mubr.f32.gmra.mrb[0].mxu0 %v425
    %v427 = vpop.f32.mrb[0].mxu0
    %v428 = vadd.f32 %v345, %v427
    %v429 = vpop.f32.mrb[0].mxu0
    %430 = vdwg.mxu0
    %431 = vmatprep.subr.mxu0 0.0
    %v432 = vand.u32 %v86, 4294901760
    %v433 = vsub.f32 %v86, %v432
    %v434 = vand.u32 %v433, 4294901760
    %435 = vmatpush1.xpose.msra.mxu0 %v434
    %436 = vmatprep.subr.mxu0 0.0
    %v437 = vand.u32 %v89, 4294901760
    %v438 = vsub.f32 %v89, %v437
    %v439 = vand.u32 %v438, 4294901760
    %440 = vmatpush1.xpose.msra.mxu0 %v439
    %441 = vmatprep.subr.mxu0 0.0
    %442 = vmatpush1.xpose.msra.mxu0 0.0
    %443 = vmatprep.subr.mxu0 0.0
    %444 = vmatpush1.xpose.msra.mxu0 0.0
    %445 = vmatprep.subr.mxu0 0.0
    %446 = vmatpush1.xpose.msra.mxu0 0.0
    %447 = vmatprep.subr.mxu0 0.0
    %448 = vmatpush1.xpose.msra.mxu0 0.0
    %449 = vmatprep.subr.mxu0 0.0
    %450 = vmatpush1.xpose.msra.mxu0 0.0
    %451 = vmatprep.subr.mxu0 0.0
    %452 = vmatpush1.xpose.msra.mxu0 0.0
    %453 = vmatprep.subr.mxu0 0.0
    %454 = vmatpush1.xpose.msra.mxu0 0.0
    %455 = vmatprep.subr.mxu0 0.0
    %456 = vmatpush1.xpose.msra.mxu0 0.0
    %457 = vmatprep.subr.mxu0 0.0
    %458 = vmatpush1.xpose.msra.mxu0 0.0
    %459 = vmatprep.subr.mxu0 0.0
    %460 = vmatpush1.xpose.msra.mxu0 0.0
    %461 = vmatprep.subr.mxu0 0.0
    %462 = vmatpush1.xpose.msra.mxu0 0.0
    %463 = vmatprep.subr.mxu0 0.0
    %464 = vmatpush1.xpose.msra.mxu0 0.0
    %465 = vmatprep.subr.mxu0 0.0
    %466 = vmatpush1.xpose.msra.mxu0 0.0
    %467 = vmatprep.subr.mxu0 0.0
    %468 = vmatpush1.xpose.msra.mxu0 0.0
    %469 = vmatprep.subr.mxu0 0.0
    %470 = vmatpush1.xpose.msra.mxu0 0.0
    %471 = vmatprep.subr.mxu0 0.0
    %472 = vmatpush1.xpose.msra.mxu0 0.0
    %473 = vmatprep.subr.mxu0 0.0
    %474 = vmatpush1.xpose.msra.mxu0 0.0
    %475 = vmatprep.subr.mxu0 0.0
    %476 = vmatpush1.xpose.msra.mxu0 0.0
    %477 = vmatprep.subr.mxu0 0.0
    %478 = vmatpush1.xpose.msra.mxu0 0.0
    %479 = vmatprep.subr.mxu0 0.0
    %480 = vmatpush1.xpose.msra.mxu0 0.0
    %481 = vmatprep.subr.mxu0 0.0
    %482 = vmatpush1.xpose.msra.mxu0 0.0
    %483 = vmatprep.subr.mxu0 0.0
    %484 = vmatpush1.xpose.msra.mxu0 0.0
    %485 = vmatprep.subr.mxu0 0.0
    %486 = vmatpush1.xpose.msra.mxu0 0.0
    %487 = vmatprep.subr.mxu0 0.0
    %488 = vmatpush1.xpose.msra.mxu0 0.0
    %489 = vmatprep.subr.mxu0 0.0
    %490 = vmatpush1.xpose.msra.mxu0 0.0
    %491 = vmatprep.subr.mxu0 0.0
    %492 = vmatpush1.xpose.msra.mxu0 0.0
    %493 = vmatprep.subr.mxu0 0.0
    %494 = vmatpush1.xpose.msra.mxu0 0.0
    %495 = vmatprep.subr.mxu0 0.0
    %496 = vmatpush1.xpose.msra.mxu0 0.0
    %497 = vmatprep.subr.mxu0 0.0
    %498 = vmatpush1.xpose.msra.mxu0 0.0
    %499 = vmatprep.subr.mxu0 0.0
    %500 = vmatpush1.xpose.msra.mxu0 0.0
    %501 = vmatprep.mubr.f32.mxu0 0.0
    %v502 = vand.u32 %v80, 4294901760
    %503 = vmatmul.mubr.f32.gmra.mrb[0].mxu0 %v502
    %v504 = vpop.f32.mrb[0].mxu0
    %v505 = vadd.f32 %v420, %v504
    %v506 = vpop.f32.mrb[0].mxu0
    %507 = vmatprep.mubr.f32.mxu0 0.0
    %v508 = vand.u32 %v83, 4294901760
    %509 = vmatmul.mubr.f32.gmra.mrb[0].mxu0 %v508
    %v510 = vpop.f32.mrb[0].mxu0
    %v511 = vadd.f32 %v428, %v510
    %v512 = vpop.f32.mrb[0].mxu0
    %513 = vdwg.mxu0
    %514 = vmatprep.subr.mxu0 0.0
    %v515 = vand.u32 %v86, 4294901760
    %516 = vmatpush1.xpose.msra.mxu0 %v515
    %517 = vmatprep.subr.mxu0 0.0
    %v518 = vand.u32 %v89, 4294901760
    %519 = vmatpush1.xpose.msra.mxu0 %v518
    %520 = vmatprep.subr.mxu0 0.0
    %521 = vmatpush1.xpose.msra.mxu0 0.0
    %522 = vmatprep.subr.mxu0 0.0
    %523 = vmatpush1.xpose.msra.mxu0 0.0
    %524 = vmatprep.subr.mxu0 0.0
    %525 = vmatpush1.xpose.msra.mxu0 0.0
    %526 = vmatprep.subr.mxu0 0.0
    %527 = vmatpush1.xpose.msra.mxu0 0.0
    %528 = vmatprep.subr.mxu0 0.0
    %529 = vmatpush1.xpose.msra.mxu0 0.0
    %530 = vmatprep.subr.mxu0 0.0
    %531 = vmatpush1.xpose.msra.mxu0 0.0
    %532 = vmatprep.subr.mxu0 0.0
    %533 = vmatpush1.xpose.msra.mxu0 0.0
    %534 = vmatprep.subr.mxu0 0.0
    %535 = vmatpush1.xpose.msra.mxu0 0.0
    %536 = vmatprep.subr.mxu0 0.0
    %537 = vmatpush1.xpose.msra.mxu0 0.0
    %538 = vmatprep.subr.mxu0 0.0
    %539 = vmatpush1.xpose.msra.mxu0 0.0
    %540 = vmatprep.subr.mxu0 0.0
    %541 = vmatpush1.xpose.msra.mxu0 0.0
    %542 = vmatprep.subr.mxu0 0.0
    %543 = vmatpush1.xpose.msra.mxu0 0.0
    %544 = vmatprep.subr.mxu0 0.0
    %545 = vmatpush1.xpose.msra.mxu0 0.0
    %546 = vmatprep.subr.mxu0 0.0
    %547 = vmatpush1.xpose.msra.mxu0 0.0
    %548 = vmatprep.subr.mxu0 0.0
    %549 = vmatpush1.xpose.msra.mxu0 0.0
    %550 = vmatprep.subr.mxu0 0.0
    %551 = vmatpush1.xpose.msra.mxu0 0.0
    %552 = vmatprep.subr.mxu0 0.0
    %553 = vmatpush1.xpose.msra.mxu0 0.0
    %554 = vmatprep.subr.mxu0 0.0
    %555 = vmatpush1.xpose.msra.mxu0 0.0
    %556 = vmatprep.subr.mxu0 0.0
    %557 = vmatpush1.xpose.msra.mxu0 0.0
    %558 = vmatprep.subr.mxu0 0.0
    %559 = vmatpush1.xpose.msra.mxu0 0.0
    %560 = vmatprep.subr.mxu0 0.0
    %561 = vmatpush1.xpose.msra.mxu0 0.0
    %562 = vmatprep.subr.mxu0 0.0
    %563 = vmatpush1.xpose.msra.mxu0 0.0
    %564 = vmatprep.subr.mxu0 0.0
    %565 = vmatpush1.xpose.msra.mxu0 0.0
    %566 = vmatprep.subr.mxu0 0.0
    %567 = vmatpush1.xpose.msra.mxu0 0.0
    %568 = vmatprep.subr.mxu0 0.0
    %569 = vmatpush1.xpose.msra.mxu0 0.0
    %570 = vmatprep.subr.mxu0 0.0
    %571 = vmatpush1.xpose.msra.mxu0 0.0
    %572 = vmatprep.subr.mxu0 0.0
    %573 = vmatpush1.xpose.msra.mxu0 0.0
    %574 = vmatprep.subr.mxu0 0.0
    %575 = vmatpush1.xpose.msra.mxu0 0.0
    %576 = vmatprep.subr.mxu0 0.0
    %577 = vmatpush1.xpose.msra.mxu0 0.0
    %578 = vmatprep.subr.mxu0 0.0
    %579 = vmatpush1.xpose.msra.mxu0 0.0
    %580 = vmatprep.mubr.f32.mxu0 0.0
    %v581 = vand.u32 %v80, 4294901760
    %582 = vmatmul.mubr.f32.gmra.mrb[0].mxu0 %v581
    %v583 = vpop.f32.mrb[0].mxu0
    %v584 = vadd.f32 %v505, %v583
    %v585 = vpop.f32.mrb[0].mxu0
    %586 = vmatprep.mubr.f32.mxu0 0.0
    %v587 = vand.u32 %v83, 4294901760
    %588 = vmatmul.mubr.f32.gmra.mrb[0].mxu0 %v587
    %v589 = vpop.f32.mrb[0].mxu0
    %v590 = vadd.f32 %v511, %v589
    %v591 = vpop.f32.mrb[0].mxu0
    %592 = vdwg.mxu0
    %v593 = vmul.f32 %v584, 2.0
    %v594 = vmul.f32 %v590, 2.0
    %v597 = vunpack.c.l.b16 %v72
    %v598 = vunpack.c.l.b16 %v73
    %v599 = vpack.c.b16 %v598, %v597
    %v602 = vunpack.c.l.b16 %v76
    %v603 = vunpack.c.l.b16 %v77
    %v604 = vpack.c.b16 %v603, %v602
    %vm605 = vcmask 130048
    %v607 = vsel %vm605, %v599, 0
    %v610 = vsel %vm605, %v604, 0
    %612 = vmatprep.subr.bf16.mxu0 0
    %613 = vmatpush1.bf16.xpose.msra.mxu0 %v610
    %614 = vmatprep.subr.bf16.mxu0 0
    %615 = vmatpush1.bf16.xpose.msra.mxu0 0
    %616 = vmatprep.subr.bf16.mxu0 0
    %617 = vmatpush1.bf16.xpose.msra.mxu0 0
    %618 = vmatprep.subr.bf16.mxu0 0
    %619 = vmatpush1.bf16.xpose.msra.mxu0 0
    %620 = vmatprep.subr.bf16.mxu0 0
    %621 = vmatpush1.bf16.xpose.msra.mxu0 0
    %622 = vmatprep.subr.bf16.mxu0 0
    %623 = vmatpush1.bf16.xpose.msra.mxu0 0
    %624 = vmatprep.subr.bf16.mxu0 0
    %625 = vmatpush1.bf16.xpose.msra.mxu0 0
    %626 = vmatprep.subr.bf16.mxu0 0
    %627 = vmatpush1.bf16.xpose.msra.mxu0 0
    %628 = vmatprep.subr.bf16.mxu0 0
    %629 = vmatpush1.bf16.xpose.msra.mxu0 0
    %630 = vmatprep.subr.bf16.mxu0 0
    %631 = vmatpush1.bf16.xpose.msra.mxu0 0
    %632 = vmatprep.subr.bf16.mxu0 0
    %633 = vmatpush1.bf16.xpose.msra.mxu0 0
    %634 = vmatprep.subr.bf16.mxu0 0
    %635 = vmatpush1.bf16.xpose.msra.mxu0 0
    %636 = vmatprep.subr.bf16.mxu0 0
    %637 = vmatpush1.bf16.xpose.msra.mxu0 0
    %638 = vmatprep.subr.bf16.mxu0 0
    %639 = vmatpush1.bf16.xpose.msra.mxu0 0
    %640 = vmatprep.subr.bf16.mxu0 0
    %641 = vmatpush1.bf16.xpose.msra.mxu0 0
    %642 = vmatprep.subr.bf16.mxu0 0
    %643 = vmatpush1.bf16.xpose.msra.mxu0 0
    %644 = vmatprep.mubr.bf16.mxu0 0
    %645 = vmatmul.mubr.bf16.gmra.mrb[0].mxu0 %v607
    %v646 = vpop.f32.mrb[0].mxu0
    %v647 = vadd.f32 0.0, %v646
    %v648 = vpop.f32.mrb[0].mxu0
    %v649 = vpop.f32.mrb[0].mxu0
    %v650 = vadd.f32 0.0, %v649
    %v651 = vpop.f32.mrb[0].mxu0
    %652 = vdwg.mxu0
    %v653 = vmul.f32 %v593, 1.442695
    %v654 = vpow.pop %v653
    %v655 = vmul.f32 %v594, 1.442695
    %v656 = vpow.pop %v655
    %v657 = vld [vmem:[#allocation2] sm:$0xff]
    %v658 = vld [vmem:[#allocation2 + $0x8] sm:$0xff]
    %v659 = vsel %vm605, %v654, 0.0
    %660 = vadd.xlane.f32.xlu0 %v659
    %v661 = vpop.xlane.xlu0 %660
    %v662 = vsel %vm605, %v656, 0.0
    %663 = vadd.xlane.f32.xlu0 %v662
    %v664 = vpop.xlane.xlu0 %663
    %v665 = vadd.f32 %v657, %v661
    %v666 = vadd.f32 %v658, %v664
    %vm667 = vcmask 7168
    %668 = vst.msk [vmem:[#allocation2] sm:$0xff] %vm667, %v665
    %669 = vst.msk [vmem:[#allocation2 + $0x8] sm:$0xff] %vm667, %v666
    %v670 = vld [vmem:[#allocation4] sm:$0xff]
    %v671 = vld [vmem:[#allocation4 + $0x8] sm:$0xff]
    %v672 = vsel %vm605, %v647, 0.0
    %673 = vadd.xlane.f32.xlu0 %v672
    %v674 = vpop.xlane.xlu0 %673
    %v675 = vsel %vm605, %v650, 0.0
    %676 = vadd.xlane.f32.xlu0 %v675
    %v677 = vpop.xlane.xlu0 %676
    %v678 = vadd.f32 %v670, %v674
    %v679 = vadd.f32 %v671, %v677
    %680 = vst.msk [vmem:[#allocation4] sm:$0xff] %vm667, %v678
    %681 = vst.msk [vmem:[#allocation4 + $0x8] sm:$0xff] %vm667, %v679
    %v682 = vld [vmem:[#allocation3] sm:$0xff]
    %v683 = vld [vmem:[#allocation3 + $0x8] sm:$0xff]
    %v684 = vmul.f32 %v593, %v647
    %v685 = vmul.f32 %v594, %v650
    %v686 = vsel %vm605, %v684, 0.0
    %687 = vadd.xlane.f32.xlu0 %v686
    %v688 = vpop.xlane.xlu0 %687
    %v689 = vsel %vm605, %v685, 0.0
    %690 = vadd.xlane.f32.xlu0 %v689
    %v691 = vpop.xlane.xlu0 %690
    %v692 = vadd.f32 %v682, %v688
    %v693 = vadd.f32 %v683, %v691
    %694 = vst.msk [vmem:[#allocation3] sm:$0xff] %vm667, %v692
    %695 = vst.msk [vmem:[#allocation3 + $0x8] sm:$0xff] %vm667, %v693
    %p696 = scmp.eq.s32.totalorder 0, 0
    // Predicated region
    $region34: #{tpu_custom_call.1} parent=1 // pred_check
      %p697 = pneg %p696
    $region35: #{tpu_custom_call.1} parent=1 // pred_check_branch
      %699 = sbr.rel (%p697) target = $region37
    $region36: #{tpu_custom_call.1} parent=1 // pred_region
      %v700 = vunpack.c.l.bf16 %v72
      %v701 = vunpack.c.l.bf16 %v73
      %v702 = vmul.f32 %v70, %v70
      %v703 = vmul.f32 %v71, %v71
      %v704 = vsel %vm78, %v702, 0.0
      %705 = vadd.xlane.f32.xlu0 %v704
      %v706 = vpop.xlane.xlu0 %705
      %v707 = vsel %vm78, %v703, 0.0
      %708 = vadd.xlane.f32.xlu0 %v707
      %v709 = vpop.xlane.xlu0 %708
      %v710 = vmul.f32 %v706, 2.0
      %v711 = vmul.f32 %v709, 2.0
      %v712 = vmul.f32 %v700, %v700
      %v713 = vmul.f32 %v701, %v701
      %v714 = vsel %vm605, %v712, 0.0
      %715 = vadd.xlane.f32.xlu0 %v714
      %v716 = vpop.xlane.xlu0 %715
      %v717 = vsel %vm605, %v713, 0.0
      %718 = vadd.xlane.f32.xlu0 %v717
      %v719 = vpop.xlane.xlu0 %718
      %v720 = vld [vmem:[#allocation2] sm:$0xff]
      %v721 = vld [vmem:[#allocation2 + $0x8] sm:$0xff]
      %v722 = vmul.f32 %v710, 1.442695
      %v723 = vpow.pop %v722
      %v724 = vmul.f32 %v711, 1.442695
      %v725 = vpow.pop %v724
      %v726 = vsub.f32 %v720, %v723
      %v727 = vsub.f32 %v721, %v725
      %728 = vst.msk [vmem:[#allocation2] sm:$0xff] %vm667, %v726
      %729 = vst.msk [vmem:[#allocation2 + $0x8] sm:$0xff] %vm667, %v727
      %v730 = vld [vmem:[#allocation4] sm:$0xff]
      %v731 = vld [vmem:[#allocation4 + $0x8] sm:$0xff]
      %v732 = vsub.f32 %v730, %v716
      %v733 = vsub.f32 %v731, %v719
      %734 = vst.msk [vmem:[#allocation4] sm:$0xff] %vm667, %v732
      %735 = vst.msk [vmem:[#allocation4 + $0x8] sm:$0xff] %vm667, %v733
      %v736 = vld [vmem:[#allocation3] sm:$0xff]
      %v737 = vld [vmem:[#allocation3 + $0x8] sm:$0xff]
      %v738 = vmul.f32 %v710, %v716
      %v739 = vmul.f32 %v711, %v719
      %v740 = vsub.f32 %v736, %v738
      %v741 = vsub.f32 %v737, %v739
      %742 = vst.msk [vmem:[#allocation3] sm:$0xff] %vm667, %v740
      %743 = vst.msk [vmem:[#allocation3 + $0x8] sm:$0xff] %vm667, %v741
    $region37: #{tpu_custom_call.1} parent=1 // pred_fallthru
      _
    // Predicated region
    $region38: #{tpu_custom_call.1} parent=1 // pred_check
      %p744 = pneg %p59
    $region39: #{tpu_custom_call.1} parent=1 // pred_check_branch
      %746 = sbr.rel (%p744) target = $region41
    $region40: #{tpu_custom_call.1} parent=1 // pred_region
      %v747 = vld [vmem:[#allocation2] sm:$0xff]
      %v748 = vld [vmem:[#allocation2 + $0x8] sm:$0xff]
      %v749 = vlog2.pop %v747
      %v750 = vmul.f32 %v749, 0.6931472
      %v751 = vlog2.pop %v748
      %v752 = vmul.f32 %v751, 0.6931472
      %v753 = vld [vmem:[#allocation3] sm:$0xff]
      %v754 = vld [vmem:[#allocation3 + $0x8] sm:$0xff]
      %v755 = vld [vmem:[#allocation4] sm:$0xff]
      %v756 = vld [vmem:[#allocation4 + $0x8] sm:$0xff]
      %v757 = vrcp.pop %v755
      %v758 = vmul.f32 %v753, %v757
      %v759 = vrcp.pop %v756
      %v760 = vmul.f32 %v754, %v759
      %v761 = vsub.f32 %v750, %v758
      %v762 = vsub.f32 %v752, %v760
      %763 = vst.msk [vmem:[%s4] sm:$0xff] %vm667, %v761
      %764 = vst.msk [vmem:[%s4 + $0x8] sm:$0xff] %vm667, %v762
    $region41: #{tpu_custom_call.1} parent=1 // pred_fallthru
      _
    // Predicated region
    $region42: #{tpu_custom_call.1} parent=1 // pred_check
      _
    $region43: #{tpu_custom_call.1} parent=1 // pred_check_branch
      %766 = sbr.rel (0) target = $region45
    $region44: #{tpu_custom_call.1} parent=1 // pred_region
      _
    $region45: #{tpu_custom_call.1} parent=1 // pred_fallthru
      _
    // Predicated region
    $region46: #{tpu_custom_call.1} parent=1 // pred_check
      _
    $region47: #{tpu_custom_call.1} parent=1 // pred_check_branch
      %768 = sbr.rel (0) target = $region49
    $region48: #{tpu_custom_call.1} parent=1 // pred_region
      _
    $region49: #{tpu_custom_call.1} parent=1 // pred_fallthru
      _
    %769 = vsyncpa [#allocation6], 1
    %770 = vsyncpa [#allocation8], 1

</llo_original>
